<compile_context>
chip_gen: v7x
topology: tpu7x:2x2x1
jax: 0.10.0
libtpu: 0.0.40
codegen_flags: <defaults>
</compile_context>

<pallas_src>
import functools

import jax
import jax.numpy as jnp
from jax import lax
from jax.experimental import pallas as pl
from jax.experimental.pallas import tpu as pltpu


def _round_up(x, m):
    return (x + m - 1) // m * m


# ----------------------------------------------------------------------------
# Pallas kernel: fused im2col + single matmul per (batch, L-tile).
# ----------------------------------------------------------------------------
def _conv1d_kernel(xc_ref, xh_ref, w_ref, o_ref, *, K, dilation, TL):
    # xc_ref: (1, C_in_p, TL)    current L-tile (bf16)
    # xh_ref: (1, C_in_p, 128)   right halo = head of the next tile (bf16)
    # w_ref : (C_out, K*C_in_p)  resident weight, tap-major contraction (bf16)
    # o_ref : (1, C_out, TL)     f32 output tile
    window = jnp.concatenate([xc_ref[0], xh_ref[0]], axis=-1)   # (C_in_p, TL+128)
    taps = [window[:, k * dilation:k * dilation + TL] for k in range(K)]
    im2col = taps[0] if K == 1 else jnp.concatenate(taps, axis=0)  # (K*C_in_p, TL)
    o_ref[0] = jnp.dot(w_ref[...], im2col,
                       preferred_element_type=jnp.float32).astype(o_ref.dtype)


def _pallas_conv1d(x_ncl, w_oik, dilation=1, tl=512,
                   compute_dtype=jnp.bfloat16):
    """1-D conv, stride=1, 'same' padding = (K-1)//2*dilation, no bias.

    x_ncl : (N, C_in, L)  f32, PyTorch NCL layout
    w_oik : (C_out, C_in, K) f32, PyTorch Conv1d weight layout
    returns (N, C_out, L) f32
    """
    N, C_in, L = x_ncl.shape
    C_out, C_in_w, K = w_oik.shape
    assert C_in == C_in_w
    assert (K - 1) * dilation <= 128, "conv halo must fit in the 128-wide lookahead block"
    pad = (K - 1) // 2 * dilation

    TL = min(_round_up(tl, 128), _round_up(L, 128))   # lane-dense L tile (mult. of 128/256)
    nLT = -(-L // TL)
    Lp = nLT * TL + 128                               # room for the last halo block
    Cp = _round_up(C_in, 8)                           # sublane-aligned channels

    # Single fused pad(+cast) of x: channel pad to Cp, left halo `pad`, right pad
    # up to Lp.  One HBM pass; replaces the transpose+pad+transpose of an NLC kernel.
    xp = jnp.pad(
        x_ncl, ((0, 0), (0, Cp - C_in), (pad, Lp - pad - L))).astype(compute_dtype)

    # Weight -> (C_out, K*Cp); contraction index = k*Cp + ci (tap-major) so it
    # matches the in-kernel im2col concatenation order.
    w_p = jnp.pad(w_oik, ((0, 0), (0, Cp - C_in), (0, 0)))        # (C_out, Cp, K)
    w2d = jnp.transpose(w_p, (0, 2, 1)).reshape(C_out, K * Cp).astype(compute_dtype)

    # Explicit VMEM budget (important on v7x: 64 MiB physical, 32 MiB default scoped).
    bf = jnp.dtype(compute_dtype).itemsize
    vmem_need = (2 * TL * Cp * bf            # x current tile, double-buffered
                 + 2 * 128 * Cp * bf         # x halo tile, double-buffered
                 + 2 * C_out * K * Cp * bf   # resident weight
                 + 2 * TL * C_out * 4        # f32 output tile, double-buffered
                 + (TL + 128) * Cp * bf      # window temp
                 + K * Cp * TL * bf          # im2col temp
                 + TL * C_out * 4)           # matmul result temp
    vmem_limit = int(min(max(2 * vmem_need, 8 * 2**20), 48 * 2**20))

    kernel = functools.partial(_conv1d_kernel, K=K, dilation=dilation, TL=TL)
    blocks_per_tile = TL // 128
    out = pl.pallas_call(
        kernel,
        out_shape=jax.ShapeDtypeStruct((N, C_out, nLT * TL), jnp.float32),
        grid_spec=pl.GridSpec(
            grid=(N, nLT),
            in_specs=[
                # current tile: xp columns [lt*TL, lt*TL + TL)
                pl.BlockSpec((1, Cp, TL), lambda n, lt: (n, 0, lt)),
                # halo: first 128 columns of the next tile
                pl.BlockSpec((1, Cp, 128),
                             lambda n, lt: (n, 0, (lt + 1) * blocks_per_tile)),
                # weight: grid-invariant index map -> fetched once, stays resident
                pl.BlockSpec((C_out, K * Cp), lambda n, lt: (0, 0)),
            ],
            out_specs=pl.BlockSpec((1, C_out, TL), lambda n, lt: (n, 0, lt)),
        ),
        compiler_params=pltpu.CompilerParams(
            dimension_semantics=("parallel", "parallel"),
            vmem_limit_bytes=vmem_limit),
    )(xp, xp, w2d)
    return out[:, :, :L]


# ----------------------------------------------------------------------------
# DynamicConv1d parameters + forward (mirrors the PyTorch module semantics).
# ----------------------------------------------------------------------------
def init_dynamic_conv1d(key, in_channels, out_channels, kernel_size=1):
    assert kernel_size in [1, 3, 5, 7, 9]
    # nn.Conv1d default init: kaiming_uniform -> U(-b, b), b = 1/sqrt(fan_in)
    fan_in = in_channels * kernel_size
    bound = 1.0 / jnp.sqrt(jnp.float32(fan_in))
    conv_weight = jax.random.uniform(
        key, (out_channels, in_channels, kernel_size),
        dtype=jnp.float32, minval=-bound, maxval=bound)
    return {
        "conv_weight": conv_weight,
        # identity "kernel transform" parameters, exactly as in __init__
        "k75": jnp.eye(5, dtype=jnp.float32) if kernel_size > 5 else None,
        "k53": jnp.eye(3, dtype=jnp.float32) if kernel_size > 3 else None,
        "k31": jnp.eye(1, dtype=jnp.float32) if kernel_size > 1 else None,
        "kernel_size": kernel_size,
        "in_channels": in_channels,
        "out_channels": out_channels,
    }


def dynamic_weight(params, active_in_channels, active_out_channels,
                   active_kernel_size):
    """Replicates DynamicConv1d.weight (TOPK mode for in/out channels)."""
    w = params["conv_weight"]
    kernel_size = params["kernel_size"]
    # TOPK in-channel slice, then TOPK out-channel slice
    w = w[:, :active_in_channels]
    w = w[:active_out_channels]
    # Kernel shrink via (identity) matmuls, same cascade as the module.
    # TODO(synk): faithful to the module, kernel_size=9 with a shrunk kernel is
    # ill-defined in the original PyTorch code too (no k97 transform).
    if kernel_size > 5 and active_kernel_size < 7:
        w = jnp.matmul(w[:, :, 1:-1], params["k75"])
    if kernel_size > 3 and active_kernel_size < 5:
        w = jnp.matmul(w[:, :, 1:-1], params["k53"])
    if kernel_size > 1 and active_kernel_size < 3:
        w = jnp.matmul(w[:, :, 1:-1], params["k31"])
    return w


def dynamic_conv1d_forward(params, x, active_in_channels=None,
                           active_out_channels=None, active_kernel_size=None,
                           dilation=1):
    """Forward of DynamicConv1d. x: (N, C_in_active, L), PyTorch NCL layout."""
    in_c = params["in_channels"] if active_in_channels is None else active_in_channels
    out_c = params["out_channels"] if active_out_channels is None else active_out_channels
    k = params["kernel_size"] if active_kernel_size is None else active_kernel_size
    # TODO(synk): only stride=1, groups=1 are supported (the module's defaults).
    w = dynamic_weight(params, in_c, out_c, k)                 # (out_c, in_c, k)
    return _pallas_conv1d(x, w, dilation=dilation)


# ----------------------------------------------------------------------------
def _reference_conv1d(x, w, dilation=1, compute_dtype=jnp.bfloat16):
    # Matches the kernel's operand precision: bf16 operands, f32 accumulation.
    xr = x.astype(compute_dtype).astype(jnp.float32)
    wr = w.astype(compute_dtype).astype(jnp.float32)
    K = w.shape[-1]
    pad = (K - 1) // 2 * dilation
    return lax.conv_general_dilated(
        xr, wr, window_strides=(1,), padding=[(pad, pad)],
        rhs_dilation=(dilation,),
        dimension_numbers=("NCH", "OIH", "NCH"),
        precision=lax.Precision.HIGHEST)


if __name__ == "__main__":
    key = jax.random.PRNGKey(0)
    k_w, k_x = jax.random.split(key)

    N, C_in, C_out, L, K = 2, 8, 16, 16, 5
    params = init_dynamic_conv1d(k_w, C_in, C_out, kernel_size=K)
    x = jax.random.normal(k_x, (N, C_in, L), dtype=jnp.float32)

    # 1) Default config -> equivalent to self.conv(x) (full weight, full kernel)
    y_full = jax.block_until_ready(dynamic_conv1d_forward(params, x))
    ref_full = _reference_conv1d(x, params["conv_weight"])
    assert y_full.shape == (N, C_out, L)
    assert jnp.allclose(y_full, ref_full, atol=1e-4, rtol=1e-4), (
        float(jnp.max(jnp.abs(y_full - ref_full))))

    # 2) Dynamic config: top-k channels + shrunk kernel (5 -> 3)
    a_in, a_out, a_k = 4, 8, 3
    x_small = x[:, :a_in]
    y_dyn = jax.block_until_ready(
        dynamic_conv1d_forward(params, x_small,
                               active_in_channels=a_in,
                               active_out_channels=a_out,
                               active_kernel_size=a_k))
    w_dyn = dynamic_weight(params, a_in, a_out, a_k)
    ref_dyn = _reference_conv1d(x_small, w_dyn)
    assert y_dyn.shape == (N, a_out, L)
    assert jnp.allclose(y_dyn, ref_dyn, atol=1e-4, rtol=1e-4), (
        float(jnp.max(jnp.abs(y_dyn - ref_dyn))))

    print("KERNEL_OK")
</pallas_src>

<mosaic_0001>
module attributes {stable_mosaic.version = 11 : i64} {
  func.func @_conv1d_kernel(%arg0: i32, %arg1: i32, %arg2: memref<1x8x128xbf16, #tpu.memory_space<vmem>>, %arg3: memref<1x8x128xbf16, #tpu.memory_space<vmem>>, %arg4: memref<16x40xbf16, #tpu.memory_space<vmem>>, %arg5: memref<1x16x128xf32, #tpu.memory_space<vmem>>) attributes {dimension_semantics = [#tpu.dimension_semantics<parallel>, #tpu.dimension_semantics<parallel>], iteration_bounds = array<i64: 2, 1>, scalar_prefetch = 0 : i64, scratch_operands = 0 : i64, tpu.core_type = #tpu.core_type<tc>, window_params = [{transform_indices = @transform_0, window_bounds = array<i64: 1, 8, 128>}, {transform_indices = @transform_1, window_bounds = array<i64: 1, 8, 128>}, {pipeline_mode = #tpu.pipeline_mode<synchronous>, transform_indices = @transform_2, window_bounds = array<i64: 16, 40>}, {transform_indices = @transform_3, window_bounds = array<i64: 1, 16, 128>}]} {
    %c0 = arith.constant 0 : index
    %c0_0 = arith.constant 0 : index
    %c0_1 = arith.constant 0 : index
    %0 = vector.load %arg2[%c0, %c0_0, %c0_1] : memref<1x8x128xbf16, #tpu.memory_space<vmem>>, vector<1x8x128xbf16>
    %1 = vector.shape_cast %0 : vector<1x8x128xbf16> to vector<8x128xbf16>
    %c0_2 = arith.constant 0 : index
    %c0_3 = arith.constant 0 : index
    %c0_4 = arith.constant 0 : index
    %2 = vector.load %arg3[%c0_2, %c0_3, %c0_4] : memref<1x8x128xbf16, #tpu.memory_space<vmem>>, vector<1x8x128xbf16>
    %3 = vector.shape_cast %2 : vector<1x8x128xbf16> to vector<8x128xbf16>
    %4 = tpu.concatenate %1, %3 in 1 : vector<8x128xbf16>, vector<8x128xbf16> -> vector<8x256xbf16>
    %5 = vector.extract_strided_slice %4 {offsets = [0, 0], sizes = [8, 128], strides = [1, 1]} : vector<8x256xbf16> to vector<8x128xbf16>
    %6 = vector.extract_strided_slice %4 {offsets = [0, 1], sizes = [8, 128], strides = [1, 1]} : vector<8x256xbf16> to vector<8x128xbf16>
    %7 = vector.extract_strided_slice %4 {offsets = [0, 2], sizes = [8, 128], strides = [1, 1]} : vector<8x256xbf16> to vector<8x128xbf16>
    %8 = vector.extract_strided_slice %4 {offsets = [0, 3], sizes = [8, 128], strides = [1, 1]} : vector<8x256xbf16> to vector<8x128xbf16>
    %9 = vector.extract_strided_slice %4 {offsets = [0, 4], sizes = [8, 128], strides = [1, 1]} : vector<8x256xbf16> to vector<8x128xbf16>
    %10 = tpu.concatenate %5, %6, %7, %8, %9 in 0 : vector<8x128xbf16>, vector<8x128xbf16>, vector<8x128xbf16>, vector<8x128xbf16>, vector<8x128xbf16> -> vector<40x128xbf16>
    %c0_5 = arith.constant 0 : index
    %c0_6 = arith.constant 0 : index
    %11 = vector.load %arg4[%c0_5, %c0_6] : memref<16x40xbf16, #tpu.memory_space<vmem>>, vector<16x40xbf16>
    %cst = arith.constant dense<0.000000e+00> : vector<16x128xf32>
    %12 = tpu.matmul %11, %10, %cst {dimension_numbers = #tpu.dot_dimension_numbers<[1], [0], [0], [1], [0, 0, 1, 1], [], []>} : vector<16x40xbf16>, vector<40x128xbf16>, vector<16x128xf32> -> vector<16x128xf32>
    %c0_7 = arith.constant 0 : index
    %c0_8 = arith.constant 0 : index
    %c0_9 = arith.constant 0 : index
    %13 = vector.load %arg5[%c0_7, %c0_8, %c0_9] : memref<1x16x128xf32, #tpu.memory_space<vmem>>, vector<1x16x128xf32>
    %14 = vector.shape_cast %13 : vector<1x16x128xf32> to vector<16x128xf32>
    %15 = vector.shape_cast %12 : vector<16x128xf32> to vector<1x16x128xf32>
    tpu.vector_store %arg5[%c0_7, %c0_8, %c0_9], %15 {strides = array<i32>} : memref<1x16x128xf32, #tpu.memory_space<vmem>>, vector<1x16x128xf32>,
    return
  }
  func.func @transform_0(%arg0: i32, %arg1: i32) -> (i32, i32, i32) {
    %c0_i32 = arith.constant 0 : i32
    %c0_i32_0 = arith.constant 0 : i32
    return %arg0, %c0_i32, %arg1 : i32, i32, i32
  }
  func.func @transform_1(%arg0: i32, %arg1: i32) -> (i32, i32, i32) {
    %c1_i32 = arith.constant 1 : i32
    %0 = arith.addi %arg1, %c1_i32 : i32
    %c1_i32_0 = arith.constant 1 : i32
    %1 = arith.muli %0, %c1_i32_0 : i32
    %c0_i32 = arith.constant 0 : i32
    %c0_i32_1 = arith.constant 0 : i32
    return %arg0, %c0_i32, %1 : i32, i32, i32
  }
  func.func @transform_2(%arg0: i32, %arg1: i32) -> (i32, i32) {
    %c0_i32 = arith.constant 0 : i32
    %c0_i32_0 = arith.constant 0 : i32
    %c0_i32_1 = arith.constant 0 : i32
    return %c0_i32, %c0_i32_0 : i32, i32
  }
  func.func @transform_3(%arg0: i32, %arg1: i32) -> (i32, i32, i32) {
    %c0_i32 = arith.constant 0 : i32
    %c0_i32_0 = arith.constant 0 : i32
    return %arg0, %c0_i32, %arg1 : i32, i32, i32
  }
}

</mosaic_0001>

<llo_original>
// kernel: tpu_custom_call.1
$region0: #{tpu_custom_call.1}
  #allocation0 [shape = 'u32[]', space=smem, size = 0x4, offset = 0x4, fixed_abs, tag = 'smem constant byte address 0x4 - core index']
  #allocation1 [shape = 'u32[144,128]{1,0:T(1,128)}', space=vmem, size = 0x12000, scoped, tag = 'internal scratch']
  %s0 = inlined_call_operand.hbm [shape: bf16[2,8,256], index: 0, kind: input, shape index: {}]
  %s1 = inlined_call_operand.hbm [shape: bf16[2,8,256], index: 1, kind: input, shape index: {}]
  %s2 = inlined_call_operand.hbm [shape: bf16[16,40], index: 2, kind: input, shape index: {}]
  %s3 = inlined_call_operand.hbm [shape: f32[2,16,128], index: 3, kind: output, shape index: {}]
  %s4 = sld [smem:[#allocation0]]
  $region57: #{tpu_custom_call.1} parent=0
    _
  %s6 = ssub.s32 1, %s4
  %s7 = scalar_select 0, %s6, %s4
  $region1: #{tpu_custom_call.1} parent=0
    #allocation2 [shape = 'u8[4096]{0}', space=vmem, size = 0x1000, scoped, tag = 'input window, operand 0']
    #allocation3 [shape = 's32[2]{0}', space=sflag, size = 0x8, scoped, tag = 'scoped memory for tpu_custom_call.1']
    #allocation4 [shape = 's32[2]{0}', space=sflag, size = 0x8, scoped, tag = 'scoped memory for tpu_custom_call.1']
    #allocation5 [shape = 'u8[4096]{0}', space=vmem, size = 0x1000, scoped, tag = 'input window, operand 1']
    #allocation6 [shape = 's32[2]{0}', space=sflag, size = 0x8, scoped, tag = 'scoped memory for tpu_custom_call.1']
    #allocation7 [shape = 'u8[4096]{0}', space=vmem, size = 0x1000, scoped, tag = 'input window, operand 2, single buffered']
    #allocation8 [shape = 'u8[16384]{0}', space=vmem, size = 0x4000, scoped, tag = 'output window, operand 0']
    %8 = vsyncpa [#allocation3], 0
    %s9 = scalar_lea.sflag [#allocation3], 1
    %10 = vsyncpa %s9, 0
    %11 = vsyncpa [#allocation6], 0
    %s12 = scalar_lea.sflag [#allocation6], 1
    %13 = vsyncpa %s12, 0
    %14 = vsyncpa [#allocation4], 0
    %s15 = scalar_lea.sflag [#allocation4], 1
    %16 = vsyncpa %s15, 0
    loop: start=0, step=1, limit=4
    $region2: #{tpu_custom_call.1} parent=1 // loop_pre_header
      _
    $region3: #{tpu_custom_call.1} parent=1 // loop_header
      %s18 = sphi 0, %s22
      %p19 = scmp.ge.s32.totalorder %s18, 4
      %s25 = sphi 0, %s37
      %s26 = sphi 0, %s33
      %s27 = sphi 0, %s25
      %s28 = sphi 0, %s26
      %s29 = sphi 0, %s27
      %s30 = sphi 0, %s28
      %s42 = sphi 0, %s44
      %s45 = sphi 0, %s42
      %s46 = sphi 0, %s45
      %s62 = sphi 0, %s46
      %s72 = sphi 0, %s74
      %s75 = sphi 0, %s72
      %s76 = sphi 0, %s75
      %s92 = sphi 0, %s76
      %s96 = sphi 0, %s96
      %s98 = sphi 0, %s96
      %s99 = sphi 0, %s98
      %s113 = sphi 0, %s99
      %s121 = sphi 0, %s123
      %s124 = sphi 0, %s121
      %s125 = sphi 0, %s124
      %s141 = sphi 0, %s125
    $region4: #{tpu_custom_call.1} parent=1 // loop_header_branch
      %21 = sbr.rel (%p19) target = $region8
    $region5: #{tpu_custom_call.1} parent=1 // loop_body
      %s23 = ssub.s32 %s18, 1
      %s24 = ssub.s32 %s18, 2
      %s31 = sadd.s32 1, %s26
      %p32 = scmp.ge.s32.totalorder %s31, 1
      %s33 = scalar_select %p32, 0, %s31
      %s34 = sadd.s32 1, %s25
      %s35 = scalar_select %p32, %s34, %s25
      %p36 = scmp.ge.s32.totalorder %s35, 2
      %s37 = scalar_select %p36, 0, %s35
      %s38 = ssub.s32 %s25, %s37
      %s39 = ssub.s32 %s26, %s33
      %s40 = sor.u32 %s38, %s39
      %p41 = scmp.eq.s32.totalorder %s40, 0
      %s43 = sadd.s32 %s42, 1
      %s44 = scalar_select %p41, %s42, %s43
      %p47 = pneg %p41
      %p48 = scmp.eq.s32.totalorder %s18, 1
      %p49 = por %p47, %p48
      %p50 = scmp.ne.s32.totalorder %s42, %s45
      %p51 = scmp.eq.s32.totalorder %s18, 0
      %p52 = por %p50, %p51
      %p53 = scmp.ne.s32.totalorder %s42, %s45
      %p54 = scmp.eq.s32.totalorder %s23, 1
      %p55 = por %p53, %p54
      %p56 = scmp.ne.s32.totalorder %s45, %s46
      %p57 = scmp.eq.s32.totalorder %s23, 0
      %p58 = por %p56, %p57
      %p59 = scmp.ne.s32.totalorder %s45, %s46
      %p60 = scmp.eq.s32.totalorder %s24, 1
      %p61 = por %p59, %p60
      %p63 = scmp.ne.s32.totalorder %s46, %s62
      %p64 = scmp.eq.s32.totalorder %s24, 0
      %p65 = por %p63, %p64
      %s66 = sadd.s32 %s26, 1
      %s67 = sadd.s32 %s33, 1
      %s68 = ssub.s32 %s25, %s37
      %s69 = ssub.s32 %s66, %s67
      %s70 = sor.u32 %s68, %s69
      %p71 = scmp.eq.s32.totalorder %s70, 0
      %s73 = sadd.s32 %s72, 1
      %s74 = scalar_select %p71, %s72, %s73
      %p77 = pneg %p71
      %p78 = scmp.eq.s32.totalorder %s18, 1
      %p79 = por %p77, %p78
      %p80 = scmp.ne.s32.totalorder %s72, %s75
      %p81 = scmp.eq.s32.totalorder %s18, 0
      %p82 = por %p80, %p81
      %p83 = scmp.ne.s32.totalorder %s72, %s75
      %p84 = scmp.eq.s32.totalorder %s23, 1
      %p85 = por %p83, %p84
      %p86 = scmp.ne.s32.totalorder %s75, %s76
      %p87 = scmp.eq.s32.totalorder %s23, 0
      %p88 = por %p86, %p87
      %p89 = scmp.ne.s32.totalorder %s75, %s76
      %p90 = scmp.eq.s32.totalorder %s24, 1
      %p91 = por %p89, %p90
      %p93 = scmp.ne.s32.totalorder %s76, %s92
      %p94 = scmp.eq.s32.totalorder %s24, 0
      %p95 = por %p93, %p94
      %s97 = sadd.s32 %s96, 1
      %p100 = scmp.eq.s32.totalorder %s18, 1
      %p101 = scmp.ne.s32.totalorder %s96, %s98
      %p102 = scmp.eq.s32.totalorder %s18, 0
      %p103 = por %p101, %p102
      %p104 = scmp.ne.s32.totalorder %s96, %s98
      %p105 = scmp.eq.s32.totalorder %s23, 1
      %p106 = por %p104, %p105
      %p107 = scmp.ne.s32.totalorder %s98, %s99
      %p108 = scmp.eq.s32.totalorder %s23, 0
      %p109 = por %p107, %p108
      %p110 = scmp.ne.s32.totalorder %s98, %s99
      %p111 = scmp.eq.s32.totalorder %s24, 1
      %p112 = por %p110, %p111
      %p114 = scmp.ne.s32.totalorder %s99, %s113
      %p115 = scmp.eq.s32.totalorder %s24, 0
      %p116 = por %p114, %p115
      %s117 = ssub.s32 %s25, %s37
      %s118 = ssub.s32 %s26, %s33
      %s119 = sor.u32 %s117, %s118
      %p120 = scmp.eq.s32.totalorder %s119, 0
      %s122 = sadd.s32 %s121, 1
      %s123 = scalar_select %p120, %s121, %s122
      %p126 = pneg %p120
      %p127 = scmp.eq.s32.totalorder %s18, 1
      %p128 = por %p126, %p127
      %p129 = scmp.ne.s32.totalorder %s121, %s124
      %p130 = scmp.eq.s32.totalorder %s18, 0
      %p131 = por %p129, %p130
      %p132 = scmp.ne.s32.totalorder %s121, %s124
      %p133 = scmp.eq.s32.totalorder %s23, 1
      %p134 = por %p132, %p133
      %p135 = scmp.ne.s32.totalorder %s124, %s125
      %p136 = scmp.eq.s32.totalorder %s23, 0
      %p137 = por %p135, %p136
      %p138 = scmp.ne.s32.totalorder %s124, %s125
      %p139 = scmp.eq.s32.totalorder %s24, 1
      %p140 = por %p138, %p139
      %p142 = scmp.ne.s32.totalorder %s125, %s141
      %p143 = scmp.eq.s32.totalorder %s24, 0
      %p144 = por %p142, %p143
      %p145 = scmp.le.s32.totalorder 1, %s18
      %p146 = scmp.lt.s32.totalorder %s18, 3
      %p147 = pnand %p145, %p146
      %p148 = pneg %p147
      // Predicated region
      $region9: #{tpu_custom_call.1} parent=5 // pred_check
        _
      $region10: #{tpu_custom_call.1} parent=5 // pred_check_branch
        %150 = sbr.rel (%p147) target = $region12
      $region11: #{tpu_custom_call.1} parent=5 // pred_region
        %s151 = ssub.s32 %s18, 1
        // Predicated region
        $region13: #{tpu_custom_call.1} parent=11 // pred_check
          %p152 = pneg %p109
        $region14: #{tpu_custom_call.1} parent=11 // pred_check_branch
          %154 = sbr.rel (%p152) target = $region16
        $region15: #{tpu_custom_call.1} parent=11 // pred_region
          %s156 = ssub.s32 128, 128
          %157 = vsyncadd [#allocation6], %s156
          %s158 = sshll.u32 [#allocation7], 4
          %s159 = int_to_ptr.vmem [resolvable:$true] %s158
          %164 = dma.hbm_to_vmem [thread:$0]  %s2, 128, %s159, [#allocation6], 64, 64, 4
        $region16: #{tpu_custom_call.1} parent=11 // pred_fallthru
          _
      $region12: #{tpu_custom_call.1} parent=5 // pred_fallthru
        _
      %p165 = scmp.lt.s32.totalorder %s18, 2
      // Predicated region
      $region17: #{tpu_custom_call.1} parent=5 // pred_check
        %p166 = pneg %p165
      $region18: #{tpu_custom_call.1} parent=5 // pred_check_branch
        %168 = sbr.rel (%p166) target = $region20
      $region19: #{tpu_custom_call.1} parent=5 // pred_region
        // Predicated region
        $region21: #{tpu_custom_call.1} parent=19 // pred_check
          %p169 = pneg %p52
        $region22: #{tpu_custom_call.1} parent=19 // pred_check_branch
          %171 = sbr.rel (%p169) target = $region24
        $region23: #{tpu_custom_call.1} parent=19 // pred_region
          %s172 = sand.u32 %s42, 1
          %s173 = scalar_lea.sflag [#allocation3], %s172
          %s174 = sand.u32 %s42, 1
          %s175 = smul.addr %s174, 4
          %s176 = scalar_lea.vmem [#allocation2], %s175
          %s178 = ssub.s32 64, 64
          %179 = vsyncadd %s173, %s178
          %s180 = smul.addr %s25, 2
          %s181 = sadd.s32 %s26, %s180
          %s182 = smul.addr %s181, 64
          %s183 = scalar_lea.hbm %s0, %s182
          %s185 = sshll.u32 %s176, 4
          %s186 = int_to_ptr.vmem [resolvable:$true] %s185
          %188 = dma.hbm_to_vmem [thread:$0]  %s183, 64, %s186, %s173
        $region24: #{tpu_custom_call.1} parent=19 // pred_fallthru
          _
        // Predicated region
        $region25: #{tpu_custom_call.1} parent=19 // pred_check
          %p189 = pneg %p82
        $region26: #{tpu_custom_call.1} parent=19 // pred_check_branch
          %191 = sbr.rel (%p189) target = $region28
        $region27: #{tpu_custom_call.1} parent=19 // pred_region
          %s192 = sand.u32 %s18, 1
          %s193 = scalar_lea.sflag [#allocation6], %s192
          %s194 = sand.u32 %s72, 1
          %s195 = smul.addr %s194, 4
          %s196 = scalar_lea.vmem [#allocation5], %s195
          %s197 = sadd.s32 %s26, 1
          %s199 = ssub.s32 64, 64
          %200 = vsyncadd %s193, %s199
          %s201 = smul.addr %s25, 2
          %s202 = sadd.s32 %s197, %s201
          %s203 = smul.addr %s202, 64
          %s204 = scalar_lea.hbm %s1, %s203
          %s206 = sshll.u32 %s196, 4
          %s207 = int_to_ptr.vmem [resolvable:$true] %s206
          %209 = dma.hbm_to_vmem [thread:$0]  %s204, 64, %s207, %s193
        $region28: #{tpu_custom_call.1} parent=19 // pred_fallthru
          _
      $region20: #{tpu_custom_call.1} parent=5 // pred_fallthru
        _
      %p210 = scmp.le.s32.totalorder 1, %s18
      %p211 = scmp.lt.s32.totalorder %s18, 3
      %p212 = pnand %p210, %p211
      %p213 = pneg %p212
      // Predicated region
      $region29: #{tpu_custom_call.1} parent=5 // pred_check
        _
      $region30: #{tpu_custom_call.1} parent=5 // pred_check_branch
        %215 = sbr.rel (%p212) target = $region32
      $region31: #{tpu_custom_call.1} parent=5 // pred_region
        %s216 = ssub.s32 %s18, 1
        %s217 = sand.u32 %s45, 1
        %s218 = scalar_lea.sflag [#allocation3], %s217
        %s219 = sand.u32 %s45, 1
        %s220 = smul.addr %s219, 4
        %s221 = scalar_lea.vmem [#allocation2], %s220
        // Predicated region
        $region33: #{tpu_custom_call.1} parent=31 // pred_check
          %p222 = pneg %p58
        $region34: #{tpu_custom_call.1} parent=31 // pred_check_branch
          %224 = sbr.rel (%p222) target = $region36
        $region35: #{tpu_custom_call.1} parent=31 // pred_region
          %225 = dma.done %s218, 64
        $region36: #{tpu_custom_call.1} parent=31 // pred_fallthru
          _
        %s226 = sand.u32 %s23, 1
        %s227 = scalar_lea.sflag [#allocation6], %s226
        %s228 = sand.u32 %s75, 1
        %s229 = smul.addr %s228, 4
        %s230 = scalar_lea.vmem [#allocation5], %s229
        // Predicated region
        $region37: #{tpu_custom_call.1} parent=31 // pred_check
          %p231 = pneg %p88
        $region38: #{tpu_custom_call.1} parent=31 // pred_check_branch
          %233 = sbr.rel (%p231) target = $region40
        $region39: #{tpu_custom_call.1} parent=31 // pred_region
          %234 = dma.done %s227, 64
        $region40: #{tpu_custom_call.1} parent=31 // pred_fallthru
          _
        // Predicated region
        $region41: #{tpu_custom_call.1} parent=31 // pred_check
          %p235 = pneg %p109
        $region42: #{tpu_custom_call.1} parent=31 // pred_check_branch
          %237 = sbr.rel (%p235) target = $region44
        $region43: #{tpu_custom_call.1} parent=31 // pred_region
          %238 = dma.done [#allocation6], 128
        $region44: #{tpu_custom_call.1} parent=31 // pred_fallthru
          _
        %s239 = sand.u32 %s45, 1
        %s240 = scalar_lea.sflag [#allocation3], %s239
        %s241 = sand.u32 %s45, 1
        %s242 = smul.addr %s241, 4
        %s243 = scalar_lea.vmem [#allocation2], %s242
        %p244 = pneg %p58
        %p245 = pneg %p55
        %s246 = sand.u32 %s23, 1
        %s247 = scalar_lea.sflag [#allocation6], %s246
        %s248 = sand.u32 %s75, 1
        %s249 = smul.addr %s248, 4
        %s250 = scalar_lea.vmem [#allocation5], %s249
        %p251 = pneg %p88
        %p252 = pneg %p85
        %p253 = pneg %p109
        %p254 = pneg %p106
        %p255 = pneg %p137
        %p256 = pneg %p134
        %s257 = sand.u32 %s124, 1
        %s258 = scalar_lea.sflag [#allocation4], %s257
        %s259 = sand.u32 %s124, 1
        %s260 = smul.addr %s259, 16
        %s261 = scalar_lea.vmem [#allocation8], %s260
        %s262 = sadd.s32 %s28, 1
        %v264 = vld [vmem:[%s221] sm:$0xf]
        %v265 = vld [vmem:[%s230] sm:$0xf]
        %v268 = vrot.slane %v264, 4
        %v269 = vrot.slane %v265, 4
        %270 = vrot.lane.b32.xlu0 %v268, 127
        %v271 = vpop.permute.xlu0 %270
        %272 = vrot.lane.b32.xlu0 %v269, 127
        %v273 = vpop.permute.xlu0 %272
        %vm274 = vcmask 1039360
        %v275 = vsel %vm274, %v271, %v273
        %276 = vrot.lane.b32.xlu0 %v264, 126
        %v277 = vpop.permute.xlu0 %276
        %278 = vrot.lane.b32.xlu0 %v265, 126
        %v279 = vpop.permute.xlu0 %278
        %vm280 = vcmask 1031168
        %v281 = vsel %vm280, %v277, %v279
        %282 = vrot.lane.b32.xlu0 %v268, 125
        %v283 = vpop.permute.xlu0 %282
        %284 = vrot.lane.b32.xlu0 %v269, 125
        %v285 = vpop.permute.xlu0 %284
        %vm286 = vcmask 1022976
        %v287 = vsel %vm286, %v283, %v285
        %288 = vrot.lane.b32.xlu0 %v264, 124
        %v289 = vpop.permute.xlu0 %288
        %290 = vrot.lane.b32.xlu0 %v265, 124
        %v291 = vpop.permute.xlu0 %290
        %vm292 = vcmask 1014784
        %v293 = vsel %vm292, %v289, %v291
        %vm294 = vcmask 1043456
        %v297 = vsel %vm294, %v264, %v275
        %v301 = vsel %vm294, %v281, %v287
        %v303 = vld [vmem:[#allocation7] sm:$0xf]
        %v304 = vld [vmem:[#allocation7 + $0x4] sm:$0xf]
        %v307 = vunpack.c.l.b16 %v303
        %v308 = vunpack.c.l.b16 %v304
        %v309 = vpack.c.b16 %v308, %v307
        %vm310 = vcmask 326656
        %v312 = vsel %vm310, %v309, 0
        %v315 = vsel %vm294, %v293, 0
        %317 = vmatprep.subr.bf16.mxu0 0
        %318 = vmatpush1.bf16.msra.mxu0 %v297
        %319 = vmatprep.subr.bf16.mxu0 0
        %320 = vmatpush1.bf16.msra.mxu0 %v301
        %321 = vmatprep.subr.bf16.mxu0 0
        %322 = vmatpush1.bf16.msra.mxu0 %v315
        %323 = vmatprep.subr.bf16.mxu0 0
        %324 = vmatpush1.bf16.msra.mxu0 0
        %325 = vmatprep.subr.bf16.mxu0 0
        %326 = vmatpush1.bf16.msra.mxu0 0
        %327 = vmatprep.subr.bf16.mxu0 0
        %328 = vmatpush1.bf16.msra.mxu0 0
        %329 = vmatprep.subr.bf16.mxu0 0
        %330 = vmatpush1.bf16.msra.mxu0 0
        %331 = vmatprep.subr.bf16.mxu0 0
        %332 = vmatpush1.bf16.msra.mxu0 0
        %333 = vmatprep.subr.bf16.mxu0 0
        %334 = vmatpush1.bf16.msra.mxu0 0
        %335 = vmatprep.subr.bf16.mxu0 0
        %336 = vmatpush1.bf16.msra.mxu0 0
        %337 = vmatprep.subr.bf16.mxu0 0
        %338 = vmatpush1.bf16.msra.mxu0 0
        %339 = vmatprep.subr.bf16.mxu0 0
        %340 = vmatpush1.bf16.msra.mxu0 0
        %341 = vmatprep.subr.bf16.mxu0 0
        %342 = vmatpush1.bf16.msra.mxu0 0
        %343 = vmatprep.subr.bf16.mxu0 0
        %344 = vmatpush1.bf16.msra.mxu0 0
        %345 = vmatprep.subr.bf16.mxu0 0
        %346 = vmatpush1.bf16.msra.mxu0 0
        %347 = vmatprep.subr.bf16.mxu0 0
        %348 = vmatpush1.bf16.msra.mxu0 0
        %349 = vmatprep.mubr.bf16.mxu0 0
        %350 = vmatmul.mubr.bf16.gmra.mrb[0].mxu0 %v312
        %v351 = vpop.f32.mrb[0].mxu0
        %v352 = vadd.f32 0.0, %v351
        %v353 = vpop.f32.mrb[0].mxu0
        %v354 = vpop.f32.mrb[0].mxu0
        %v355 = vadd.f32 0.0, %v354
        %v356 = vpop.f32.mrb[0].mxu0
        %357 = vdwg.mxu0
        %358 = vst [vmem:[%s261] sm:$0xff] %v352
        %359 = vst [vmem:[%s261 + $0x8] sm:$0xff] %v355
        %s360 = sand.u32 %s124, 1
        %s361 = scalar_lea.sflag [#allocation4], %s360
        %s362 = sand.u32 %s124, 1
        %s363 = smul.addr %s362, 16
        %s364 = scalar_lea.vmem [#allocation8], %s363
        // Predicated region
        $region45: #{tpu_custom_call.1} parent=31 // pred_check
          %p365 = pneg %p134
        $region46: #{tpu_custom_call.1} parent=31 // pred_check_branch
          %367 = sbr.rel (%p365) target = $region48
        $region47: #{tpu_custom_call.1} parent=31 // pred_region
          %s369 = ssub.s32 256, 256
          %370 = vsyncadd %s361, %s369
          %s371 = smul.addr %s27, 2
          %s372 = sadd.s32 %s28, %s371
          %s373 = smul.addr %s372, 128
          %s374 = scalar_lea.hbm %s3, %s373
          %s375 = sshll.u32 %s364, 4
          %s376 = int_to_ptr.vmem [resolvable:$true] %s375
          %381 = dma.vmem_to_hbm [thread:$0]  %s376, 256, %s374, %s361, 128, 128, 8
        $region48: #{tpu_custom_call.1} parent=31 // pred_fallthru
          _
      $region32: #{tpu_custom_call.1} parent=5 // pred_fallthru
        _
      %p382 = scmp.le.s32.totalorder 2, %s18
      // Predicated region
      $region49: #{tpu_custom_call.1} parent=5 // pred_check
        %p383 = pneg %p382
      $region50: #{tpu_custom_call.1} parent=5 // pred_check_branch
        %385 = sbr.rel (%p383) target = $region52
      $region51: #{tpu_custom_call.1} parent=5 // pred_region
        %s386 = ssub.s32 %s18, 2
        // Predicated region
        $region53: #{tpu_custom_call.1} parent=51 // pred_check
          %p387 = pneg %p140
        $region54: #{tpu_custom_call.1} parent=51 // pred_check_branch
          %389 = sbr.rel (%p387) target = $region56
        $region55: #{tpu_custom_call.1} parent=51 // pred_region
          %s390 = sand.u32 %s125, 1
          %s391 = scalar_lea.sflag [#allocation4], %s390
          %s392 = sand.u32 %s125, 1
          %s393 = smul.addr %s392, 16
          %s394 = scalar_lea.vmem [#allocation8], %s393
          %395 = dma.done %s391, 256
        $region56: #{tpu_custom_call.1} parent=51 // pred_fallthru
          _
      $region52: #{tpu_custom_call.1} parent=5 // pred_fallthru
        _
    $region6: #{tpu_custom_call.1} parent=1 // loop_footer
      %s22 = sadd.s32 1, %s18
    $region7: #{tpu_custom_call.1} parent=1 // loop_footer_branch
      %17 = sbr.rel target = $region3
    $region8: #{tpu_custom_call.1} parent=1 // loop_exit
      _
    %396 = vsyncpa [#allocation3], 1
    %s397 = scalar_lea.sflag [#allocation3], 1
    %398 = vsyncpa %s397, 1
    %399 = vsyncpa [#allocation6], 1
    %s400 = scalar_lea.sflag [#allocation6], 1
    %401 = vsyncpa %s400, 1
    %402 = vsyncpa [#allocation4], 1
    %s403 = scalar_lea.sflag [#allocation4], 1
    %404 = vsyncpa %s403, 1

</llo_original>
